<compile_context>
chip_gen: v5e
topology: v5e:2x2
jax: 0.10.0
libtpu: 0.0.40
codegen_flags: <defaults>
</compile_context>

<pallas_src>
import functools

import jax
import jax.numpy as jnp
from jax import lax
from jax.experimental import pallas as pl
from jax.experimental.pallas import tpu as pltpu


def _pick_tile(n, cap=512):
    """Row tile: whole N when small, else the largest 8-aligned divisor <= cap."""
    if n <= cap:
        return n
    for t in range(cap, 7, -8):
        if n % t == 0:
            return t
    return n


def _vmem_limit(nbytes):
    # Generous headroom, floored at the v5e default scoped limit and capped at
    # v7x physical VMEM.
    return int(min(max(2 * nbytes, 16 * 1024 * 1024), 64 * 1024 * 1024))


# -----------------------------------------------------------------------------
# Kernel A: fused QKV projection.  qkv = x @ Wqkv^T + b; q pre-scaled; bf16 out.
# -----------------------------------------------------------------------------
def _qkv_proj_kernel(x_ref, wqkv_ref, bqkv_ref, q_ref, k_ref, v_ref, *, scale):
    c = x_ref.shape[-1]
    x = x_ref[...].astype(jnp.bfloat16)            # bf16 MXU operand
    w = wqkv_ref[...]                              # (3C, C) PyTorch layout, bf16
    qkv = lax.dot_general(x, w, (((1,), (1,)), ((), ())),
                          preferred_element_type=jnp.float32)   # (Tm, 3C) f32 acc
    qkv = qkv + bqkv_ref[...]
    # Fold the attention scale into q here instead of the N*N score matrix.
    q_ref[...] = (qkv[:, :c] * scale).astype(q_ref.dtype)
    k_ref[...] = qkv[:, c:2 * c].astype(k_ref.dtype)
    v_ref[...] = qkv[:, 2 * c:].astype(v_ref.dtype)


# -----------------------------------------------------------------------------
# Kernel B: per (batch, query-tile) attention + fused output projection.
# -----------------------------------------------------------------------------
def _attn_proj_kernel(q_ref, k_ref, v_ref, wproj_ref, bproj_ref, o_ref,
                      concat_ref, *, num_heads):
    c = q_ref.shape[-1]
    hd = c // num_heads

    # Static head loop with static lane slices; each head's intermediates are
    # retired into the VMEM concat scratch, so only one head's (Tq, N) scores
    # need to stay live.
    # TODO(synk): for very large H*N, move heads onto the grid (head-major
    # q/k/v layout) to hard-bound vreg live ranges.
    for h in range(num_heads):
        q_h = q_ref[:, h * hd:(h + 1) * hd]        # (Tq, hd) bf16, pre-scaled
        k_h = k_ref[:, h * hd:(h + 1) * hd]        # (N, hd)  bf16
        v_h = v_ref[:, h * hd:(h + 1) * hd]        # (N, hd)  bf16

        # scores = q @ k^T : bf16 operands, f32 accumulation on the MXU.
        s = lax.dot_general(q_h, k_h, (((1,), (1,)), ((), ())),
                            preferred_element_type=jnp.float32)  # (Tq, N)

        # Numerically stable softmax; normalization deferred past the PV
        # matmul (N*hd mults) using the EUP approx reciprocal.
        m = jnp.max(s, axis=-1, keepdims=True)
        e = jnp.exp(s - m)
        denom = jnp.sum(e, axis=-1, keepdims=True)
        o_h = jnp.dot(e.astype(jnp.bfloat16), v_h,
                      preferred_element_type=jnp.float32)         # (Tq, hd)
        o_h = o_h * pl.reciprocal(denom, approx=True)
        # TODO(synk): attn_drop / proj_drop are identity (eval mode, p=0.0).
        concat_ref[:, h * hd:(h + 1) * hd] = o_h.astype(concat_ref.dtype)

    # One full-depth (K = C) projection: concat(heads) @ Wproj^T + b.
    out = lax.dot_general(concat_ref[...], wproj_ref[...],
                          (((1,), (1,)), ((), ())),
                          preferred_element_type=jnp.float32)     # (Tq, C)
    o_ref[...] = (out + bproj_ref[...]).astype(o_ref.dtype)


def multi_head_attention(x, qkv_weight, qkv_bias, proj_weight, proj_bias,
                         num_heads):
    """x: (B, N, C); qkv_weight: (3C, C) [PyTorch layout]; qkv_bias: (3C,) or
    None; proj_weight: (C, C); proj_bias: (C,).  Returns (B, N, C)."""
    B, N, C = x.shape
    assert C % num_heads == 0
    hd = C // num_heads
    scale = float(hd) ** -0.5

    # Weights stay in PyTorch (out, in) layout (no per-call transpose); only a
    # bf16 cast so the MXU sees native-rate operands.
    wqkv = qkv_weight.astype(jnp.bfloat16)     # (3C, C)
    wproj = proj_weight.astype(jnp.bfloat16)   # (C, C)
    if qkv_bias is None:
        bqkv = jnp.zeros((1, 3 * C), jnp.float32)
    else:
        bqkv = qkv_bias.astype(jnp.float32).reshape(1, 3 * C)
    bproj = proj_bias.astype(jnp.float32).reshape(1, C)

    tm = _pick_tile(N)          # rows per QKV-projection step
    tq = _pick_tile(N)          # query rows per attention step
    bf16_b = 2

    # ---------------- Kernel A: QKV projection ----------------
    est_a = (2 * tm * C * x.dtype.itemsize      # x tile (double-buffered)
             + 2 * 3 * C * C * bf16_b           # wqkv (resident)
             + 2 * 3 * C * 4                    # qkv bias
             + 2 * 3 * tm * C * bf16_b)         # q/k/v output tiles
    qkv_out = jax.ShapeDtypeStruct((B, N, C), jnp.bfloat16)
    q, k, v = pl.pallas_call(
        functools.partial(_qkv_proj_kernel, scale=scale),
        out_shape=(qkv_out, qkv_out, qkv_out),
        grid_spec=pltpu.PrefetchScalarGridSpec(
            num_scalar_prefetch=0,
            grid=(B, N // tm),
            in_specs=[
                pl.BlockSpec((None, tm, C), lambda b, t: (b, t, 0)),
                # constant index_map -> DMA'd once, resident across the grid
                pl.BlockSpec((3 * C, C), lambda b, t: (0, 0)),
                pl.BlockSpec((1, 3 * C), lambda b, t: (0, 0)),
            ],
            out_specs=[
                pl.BlockSpec((None, tm, C), lambda b, t: (b, t, 0)),
                pl.BlockSpec((None, tm, C), lambda b, t: (b, t, 0)),
                pl.BlockSpec((None, tm, C), lambda b, t: (b, t, 0)),
            ],
        ),
        compiler_params=pltpu.CompilerParams(
            dimension_semantics=("parallel", "parallel"),
            vmem_limit_bytes=_vmem_limit(est_a)),
    )(x, wqkv, bqkv)

    # ---------------- Kernel B: attention + projection ----------------
    est_b = (2 * tq * C * bf16_b                # q tile
             + 2 * 2 * N * C * bf16_b           # k, v (full sequence, resident per batch)
             + 2 * C * C * bf16_b               # wproj (resident)
             + 2 * C * 4                        # proj bias
             + 2 * tq * C * x.dtype.itemsize    # output tile
             + tq * C * bf16_b                  # concat scratch
             + 2 * tq * N * 4)                  # score-intermediate headroom
    out = pl.pallas_call(
        functools.partial(_attn_proj_kernel, num_heads=num_heads),
        out_shape=jax.ShapeDtypeStruct((B, N, C), x.dtype),
        grid_spec=pltpu.PrefetchScalarGridSpec(
            num_scalar_prefetch=0,
            grid=(B, N // tq),
            in_specs=[
                pl.BlockSpec((None, tq, C), lambda b, qi: (b, qi, 0)),
                pl.BlockSpec((None, N, C), lambda b, qi: (b, 0, 0)),
                pl.BlockSpec((None, N, C), lambda b, qi: (b, 0, 0)),
                pl.BlockSpec((C, C), lambda b, qi: (0, 0)),
                pl.BlockSpec((1, C), lambda b, qi: (0, 0)),
            ],
            out_specs=pl.BlockSpec((None, tq, C), lambda b, qi: (b, qi, 0)),
            scratch_shapes=[pltpu.VMEM((tq, C), jnp.bfloat16)],
        ),
        compiler_params=pltpu.CompilerParams(
            dimension_semantics=("parallel", "parallel"),
            vmem_limit_bytes=_vmem_limit(est_b)),
    )(q, k, v, wproj, bproj)

    return out


def _reference(x, qkv_weight, qkv_bias, proj_weight, proj_bias, num_heads):
    """Pure-JAX f32 reimplementation of the PyTorch forward (eval mode)."""
    B, N, C = x.shape
    hd = C // num_heads
    scale = float(hd) ** -0.5

    qkv = jnp.einsum("bnc,dc->bnd", x, qkv_weight)
    if qkv_bias is not None:
        qkv = qkv + qkv_bias
    qkv = qkv.reshape(B, N, 3, num_heads, hd).transpose(2, 0, 3, 1, 4)
    q, k, v = qkv[0], qkv[1], qkv[2]                     # (B, H, N, hd)

    attn = jnp.einsum("bhnd,bhmd->bhnm", q, k) * scale
    attn = jax.nn.softmax(attn, axis=-1)
    o = jnp.einsum("bhnm,bhmd->bhnd", attn, v)
    o = o.transpose(0, 2, 1, 3).reshape(B, N, C)
    return jnp.einsum("bnc,dc->bnd", o, proj_weight) + proj_bias


if __name__ == "__main__":
    # Small shapes consistent with the module.
    B, N, C = 2, 8, 32
    num_heads = 4

    key = jax.random.PRNGKey(0)
    kx, kw1, kw2, kb2 = jax.random.split(key, 4)

    x = jax.random.normal(kx, (B, N, C), dtype=jnp.float32)
    qkv_weight = jax.random.normal(kw1, (3 * C, C), dtype=jnp.float32) * 0.05
    qkv_bias = None  # module default: qkv_bias=False
    proj_weight = jax.random.normal(kw2, (C, C), dtype=jnp.float32) * 0.05
    proj_bias = jax.random.normal(kb2, (C,), dtype=jnp.float32) * 0.05

    out = multi_head_attention(x, qkv_weight, qkv_bias, proj_weight,
                               proj_bias, num_heads)
    out = jax.block_until_ready(out)

    ref = _reference(x, qkv_weight, qkv_bias, proj_weight, proj_bias,
                     num_heads)

    assert out.shape == (B, N, C)
    # bf16 MXU operands + approx reciprocal -> looser tolerance than pure f32.
    assert jnp.allclose(out, ref, atol=2e-2, rtol=2e-2), (
        float(jnp.max(jnp.abs(out - ref))))
    print("KERNEL_OK")
</pallas_src>

<mosaic_0001>
module attributes {stable_mosaic.version = 11 : i64} {
  func.func @_qkv_proj_kernel(%arg0: i32, %arg1: i32, %arg2: memref<1x8x32xf32, #tpu.memory_space<vmem>>, %arg3: memref<96x32xbf16, #tpu.memory_space<vmem>>, %arg4: memref<1x96xf32, #tpu.memory_space<vmem>>, %arg5: memref<1x8x32xbf16, #tpu.memory_space<vmem>>, %arg6: memref<1x8x32xbf16, #tpu.memory_space<vmem>>, %arg7: memref<1x8x32xbf16, #tpu.memory_space<vmem>>) attributes {dimension_semantics = [#tpu.dimension_semantics<parallel>, #tpu.dimension_semantics<parallel>], iteration_bounds = array<i64: 2, 1>, scalar_prefetch = 0 : i64, scratch_operands = 0 : i64, tpu.core_type = #tpu.core_type<tc>, window_params = [{transform_indices = @transform_0, window_bounds = array<i64: 1, 8, 32>}, {pipeline_mode = #tpu.pipeline_mode<synchronous>, transform_indices = @transform_1, window_bounds = array<i64: 96, 32>}, {pipeline_mode = #tpu.pipeline_mode<synchronous>, transform_indices = @transform_2, window_bounds = array<i64: 1, 96>}, {transform_indices = @transform_3, window_bounds = array<i64: 1, 8, 32>}, {transform_indices = @transform_4, window_bounds = array<i64: 1, 8, 32>}, {transform_indices = @transform_5, window_bounds = array<i64: 1, 8, 32>}]} {
    %c0 = arith.constant 0 : index
    %c0_0 = arith.constant 0 : index
    %c0_1 = arith.constant 0 : index
    %0 = vector.load %arg2[%c0, %c0_0, %c0_1] : memref<1x8x32xf32, #tpu.memory_space<vmem>>, vector<1x8x32xf32>
    %1 = vector.shape_cast %0 : vector<1x8x32xf32> to vector<8x32xf32>
    %2 = arith.truncf %1 : vector<8x32xf32> to vector<8x32xbf16>
    %c0_2 = arith.constant 0 : index
    %c0_3 = arith.constant 0 : index
    %3 = vector.load %arg3[%c0_2, %c0_3] : memref<96x32xbf16, #tpu.memory_space<vmem>>, vector<96x32xbf16>
    %cst = arith.constant dense<0.000000e+00> : vector<8x96xf32>
    %4 = tpu.matmul %2, %3, %cst {dimension_numbers = #tpu.dot_dimension_numbers<[1], [1], [0], [0], [0, 0, 1, 0], [], []>} : vector<8x32xbf16>, vector<96x32xbf16>, vector<8x96xf32> -> vector<8x96xf32>
    %c0_4 = arith.constant 0 : index
    %c0_5 = arith.constant 0 : index
    %5 = vector.load %arg4[%c0_4, %c0_5] : memref<1x96xf32, #tpu.memory_space<vmem>>, vector<1x96xf32>
    %6 = vector.broadcast %5 : vector<1x96xf32> to vector<8x96xf32>
    %7 = arith.addf %4, %6 : vector<8x96xf32>
    %8 = vector.extract_strided_slice %7 {offsets = [0, 0], sizes = [8, 32], strides = [1, 1]} : vector<8x96xf32> to vector<8x32xf32>
    %cst_6 = arith.constant 0.353553385 : f32
    %9 = vector.broadcast %cst_6 : f32 to vector<8x32xf32>
    %10 = arith.mulf %8, %9 : vector<8x32xf32>
    %11 = arith.truncf %10 : vector<8x32xf32> to vector<8x32xbf16>
    %c0_7 = arith.constant 0 : index
    %c0_8 = arith.constant 0 : index
    %c0_9 = arith.constant 0 : index
    %12 = vector.load %arg5[%c0_7, %c0_8, %c0_9] : memref<1x8x32xbf16, #tpu.memory_space<vmem>>, vector<1x8x32xbf16>
    %13 = vector.shape_cast %12 : vector<1x8x32xbf16> to vector<8x32xbf16>
    %14 = vector.shape_cast %11 : vector<8x32xbf16> to vector<1x8x32xbf16>
    tpu.vector_store %arg5[%c0_7, %c0_8, %c0_9], %14 {strides = array<i32>} : memref<1x8x32xbf16, #tpu.memory_space<vmem>>, vector<1x8x32xbf16>,
    %15 = vector.extract_strided_slice %7 {offsets = [0, 32], sizes = [8, 32], strides = [1, 1]} : vector<8x96xf32> to vector<8x32xf32>
    %16 = arith.truncf %15 : vector<8x32xf32> to vector<8x32xbf16>
    %c0_10 = arith.constant 0 : index
    %c0_11 = arith.constant 0 : index
    %c0_12 = arith.constant 0 : index
    %17 = vector.load %arg6[%c0_10, %c0_11, %c0_12] : memref<1x8x32xbf16, #tpu.memory_space<vmem>>, vector<1x8x32xbf16>
    %18 = vector.shape_cast %17 : vector<1x8x32xbf16> to vector<8x32xbf16>
    %19 = vector.shape_cast %16 : vector<8x32xbf16> to vector<1x8x32xbf16>
    tpu.vector_store %arg6[%c0_10, %c0_11, %c0_12], %19 {strides = array<i32>} : memref<1x8x32xbf16, #tpu.memory_space<vmem>>, vector<1x8x32xbf16>,
    %20 = vector.extract_strided_slice %7 {offsets = [0, 64], sizes = [8, 32], strides = [1, 1]} : vector<8x96xf32> to vector<8x32xf32>
    %21 = arith.truncf %20 : vector<8x32xf32> to vector<8x32xbf16>
    %c0_13 = arith.constant 0 : index
    %c0_14 = arith.constant 0 : index
    %c0_15 = arith.constant 0 : index
    %22 = vector.load %arg7[%c0_13, %c0_14, %c0_15] : memref<1x8x32xbf16, #tpu.memory_space<vmem>>, vector<1x8x32xbf16>
    %23 = vector.shape_cast %22 : vector<1x8x32xbf16> to vector<8x32xbf16>
    %24 = vector.shape_cast %21 : vector<8x32xbf16> to vector<1x8x32xbf16>
    tpu.vector_store %arg7[%c0_13, %c0_14, %c0_15], %24 {strides = array<i32>} : memref<1x8x32xbf16, #tpu.memory_space<vmem>>, vector<1x8x32xbf16>,
    return
  }
  func.func @transform_0(%arg0: i32, %arg1: i32) -> (i32, i32, i32) {
    %c0_i32 = arith.constant 0 : i32
    %c0_i32_0 = arith.constant 0 : i32
    return %arg0, %arg1, %c0_i32 : i32, i32, i32
  }
  func.func @transform_1(%arg0: i32, %arg1: i32) -> (i32, i32) {
    %c0_i32 = arith.constant 0 : i32
    %c0_i32_0 = arith.constant 0 : i32
    %c0_i32_1 = arith.constant 0 : i32
    return %c0_i32, %c0_i32_0 : i32, i32
  }
  func.func @transform_2(%arg0: i32, %arg1: i32) -> (i32, i32) {
    %c0_i32 = arith.constant 0 : i32
    %c0_i32_0 = arith.constant 0 : i32
    %c0_i32_1 = arith.constant 0 : i32
    return %c0_i32, %c0_i32_0 : i32, i32
  }
  func.func @transform_3(%arg0: i32, %arg1: i32) -> (i32, i32, i32) {
    %c0_i32 = arith.constant 0 : i32
    %c0_i32_0 = arith.constant 0 : i32
    return %arg0, %arg1, %c0_i32 : i32, i32, i32
  }
  func.func @transform_4(%arg0: i32, %arg1: i32) -> (i32, i32, i32) {
    %c0_i32 = arith.constant 0 : i32
    %c0_i32_0 = arith.constant 0 : i32
    return %arg0, %arg1, %c0_i32 : i32, i32, i32
  }
  func.func @transform_5(%arg0: i32, %arg1: i32) -> (i32, i32, i32) {
    %c0_i32 = arith.constant 0 : i32
    %c0_i32_0 = arith.constant 0 : i32
    return %arg0, %arg1, %c0_i32 : i32, i32, i32
  }
}

</mosaic_0001>

<llo_original>
// kernel: tpu_custom_call.1
$region0: #{tpu_custom_call.1}
  #allocation0 [shape = 'u32[]', space=smem, size = 0x4, offset = 0x4, fixed_abs, tag = 'smem constant byte address 0x4 - core index']
  #allocation1 [shape = 'u32[72,128]{1,0:T(1,128)}', space=vmem, size = 0x9000, scoped, tag = 'internal scratch']
  %s0 = inlined_call_operand.vmem [shape: f32[2,8,32], index: 0, kind: input, shape index: {}]
  %s1 = inlined_call_operand.vmem [shape: bf16[96,32], index: 1, kind: input, shape index: {}]
  %s2 = inlined_call_operand.vmem [shape: f32[1,96], index: 2, kind: input, shape index: {}]
  %s3 = inlined_call_operand.hbm [shape: bf16[2,8,32], index: 3, kind: output, shape index: {0}]
  %s4 = inlined_call_operand.hbm [shape: bf16[2,8,32], index: 4, kind: output, shape index: {1}]
  %s5 = inlined_call_operand.hbm [shape: bf16[2,8,32], index: 5, kind: output, shape index: {2}]
  %6 = xla_tuple %s3, %s4, %s5
  %s7 = sld [smem:[#allocation0]]
  $region61: #{tpu_custom_call.1} parent=0
    _
  %s9 = ssub.s32 1, %s7
  %s10 = scalar_select 0, %s9, %s7
  $region1: #{tpu_custom_call.1} parent=0
    #allocation2 [shape = 'u8[4096]{0}', space=vmem, size = 0x1000, scoped, tag = 'output window, operand 0']
    #allocation3 [shape = 's32[2]{0}', space=sflag, size = 0x8, scoped, tag = 'scoped memory for tpu_custom_call.1']
    #allocation4 [shape = 'u8[4096]{0}', space=vmem, size = 0x1000, scoped, tag = 'output window, operand 1']
    #allocation5 [shape = 's32[2]{0}', space=sflag, size = 0x8, scoped, tag = 'scoped memory for tpu_custom_call.1']
    #allocation6 [shape = 'u8[4096]{0}', space=vmem, size = 0x1000, scoped, tag = 'output window, operand 2']
    %11 = vsyncpa [#allocation3], 0
    %s12 = scalar_lea.sflag [#allocation3], 1
    %13 = vsyncpa %s12, 0
    %14 = vsyncpa [#allocation5], 0
    %s15 = scalar_lea.sflag [#allocation5], 1
    %16 = vsyncpa %s15, 0
    loop: start=0, step=1, limit=4
    $region2: #{tpu_custom_call.1} parent=1 // loop_pre_header
      _
    $region3: #{tpu_custom_call.1} parent=1 // loop_header
      %s18 = sphi 0, %s22
      %p19 = scmp.ge.s32.totalorder %s18, 4
      %s25 = sphi 0, %s37
      %s26 = sphi 0, %s33
      %s27 = sphi 0, %s25
      %s28 = sphi 0, %s26
      %s29 = sphi 0, %s27
      %s30 = sphi 0, %s28
      %s42 = sphi 0, %s44
      %s45 = sphi 0, %s42
      %s46 = sphi 0, %s45
      %s62 = sphi 0, %s46
      %s66 = sphi 0, %s66
      %s68 = sphi 0, %s66
      %s69 = sphi 0, %s68
      %s83 = sphi 0, %s69
      %s87 = sphi 0, %s87
      %s89 = sphi 0, %s87
      %s90 = sphi 0, %s89
      %s104 = sphi 0, %s90
      %s112 = sphi 0, %s114
      %s115 = sphi 0, %s112
      %s116 = sphi 0, %s115
      %s132 = sphi 0, %s116
      %s140 = sphi 0, %s142
      %s143 = sphi 0, %s140
      %s144 = sphi 0, %s143
      %s160 = sphi 0, %s144
      %s168 = sphi 0, %s170
      %s171 = sphi 0, %s168
      %s172 = sphi 0, %s171
      %s188 = sphi 0, %s172
    $region4: #{tpu_custom_call.1} parent=1 // loop_header_branch
      %21 = sbr.rel (%p19) target = $region8
    $region5: #{tpu_custom_call.1} parent=1 // loop_body
      %s23 = ssub.s32 %s18, 1
      %s24 = ssub.s32 %s18, 2
      %s31 = sadd.s32 1, %s26
      %p32 = scmp.ge.s32.totalorder %s31, 1
      %s33 = scalar_select %p32, 0, %s31
      %s34 = sadd.s32 1, %s25
      %s35 = scalar_select %p32, %s34, %s25
      %p36 = scmp.ge.s32.totalorder %s35, 2
      %s37 = scalar_select %p36, 0, %s35
      %s38 = ssub.s32 %s25, %s37
      %s39 = ssub.s32 %s26, %s33
      %s40 = sor.u32 %s38, %s39
      %p41 = scmp.eq.s32.totalorder %s40, 0
      %s43 = sadd.s32 %s42, 1
      %s44 = scalar_select %p41, %s42, %s43
      %p47 = pneg %p41
      %p48 = scmp.eq.s32.totalorder %s18, 1
      %p49 = por %p47, %p48
      %p50 = scmp.ne.s32.totalorder %s42, %s45
      %p51 = scmp.eq.s32.totalorder %s18, 0
      %p52 = por %p50, %p51
      %p53 = scmp.ne.s32.totalorder %s42, %s45
      %p54 = scmp.eq.s32.totalorder %s23, 1
      %p55 = por %p53, %p54
      %p56 = scmp.ne.s32.totalorder %s45, %s46
      %p57 = scmp.eq.s32.totalorder %s23, 0
      %p58 = por %p56, %p57
      %p59 = scmp.ne.s32.totalorder %s45, %s46
      %p60 = scmp.eq.s32.totalorder %s24, 1
      %p61 = por %p59, %p60
      %p63 = scmp.ne.s32.totalorder %s46, %s62
      %p64 = scmp.eq.s32.totalorder %s24, 0
      %p65 = por %p63, %p64
      %s67 = sadd.s32 %s66, 1
      %p70 = scmp.eq.s32.totalorder %s18, 1
      %p71 = scmp.ne.s32.totalorder %s66, %s68
      %p72 = scmp.eq.s32.totalorder %s18, 0
      %p73 = por %p71, %p72
      %p74 = scmp.ne.s32.totalorder %s66, %s68
      %p75 = scmp.eq.s32.totalorder %s23, 1
      %p76 = por %p74, %p75
      %p77 = scmp.ne.s32.totalorder %s68, %s69
      %p78 = scmp.eq.s32.totalorder %s23, 0
      %p79 = por %p77, %p78
      %p80 = scmp.ne.s32.totalorder %s68, %s69
      %p81 = scmp.eq.s32.totalorder %s24, 1
      %p82 = por %p80, %p81
      %p84 = scmp.ne.s32.totalorder %s69, %s83
      %p85 = scmp.eq.s32.totalorder %s24, 0
      %p86 = por %p84, %p85
      %s88 = sadd.s32 %s87, 1
      %p91 = scmp.eq.s32.totalorder %s18, 1
      %p92 = scmp.ne.s32.totalorder %s87, %s89
      %p93 = scmp.eq.s32.totalorder %s18, 0
      %p94 = por %p92, %p93
      %p95 = scmp.ne.s32.totalorder %s87, %s89
      %p96 = scmp.eq.s32.totalorder %s23, 1
      %p97 = por %p95, %p96
      %p98 = scmp.ne.s32.totalorder %s89, %s90
      %p99 = scmp.eq.s32.totalorder %s23, 0
      %p100 = por %p98, %p99
      %p101 = scmp.ne.s32.totalorder %s89, %s90
      %p102 = scmp.eq.s32.totalorder %s24, 1
      %p103 = por %p101, %p102
      %p105 = scmp.ne.s32.totalorder %s90, %s104
      %p106 = scmp.eq.s32.totalorder %s24, 0
      %p107 = por %p105, %p106
      %s108 = ssub.s32 %s25, %s37
      %s109 = ssub.s32 %s26, %s33
      %s110 = sor.u32 %s108, %s109
      %p111 = scmp.eq.s32.totalorder %s110, 0
      %s113 = sadd.s32 %s112, 1
      %s114 = scalar_select %p111, %s112, %s113
      %p117 = pneg %p111
      %p118 = scmp.eq.s32.totalorder %s18, 1
      %p119 = por %p117, %p118
      %p120 = scmp.ne.s32.totalorder %s112, %s115
      %p121 = scmp.eq.s32.totalorder %s18, 0
      %p122 = por %p120, %p121
      %p123 = scmp.ne.s32.totalorder %s112, %s115
      %p124 = scmp.eq.s32.totalorder %s23, 1
      %p125 = por %p123, %p124
      %p126 = scmp.ne.s32.totalorder %s115, %s116
      %p127 = scmp.eq.s32.totalorder %s23, 0
      %p128 = por %p126, %p127
      %p129 = scmp.ne.s32.totalorder %s115, %s116
      %p130 = scmp.eq.s32.totalorder %s24, 1
      %p131 = por %p129, %p130
      %p133 = scmp.ne.s32.totalorder %s116, %s132
      %p134 = scmp.eq.s32.totalorder %s24, 0
      %p135 = por %p133, %p134
      %s136 = ssub.s32 %s25, %s37
      %s137 = ssub.s32 %s26, %s33
      %s138 = sor.u32 %s136, %s137
      %p139 = scmp.eq.s32.totalorder %s138, 0
      %s141 = sadd.s32 %s140, 1
      %s142 = scalar_select %p139, %s140, %s141
      %p145 = pneg %p139
      %p146 = scmp.eq.s32.totalorder %s18, 1
      %p147 = por %p145, %p146
      %p148 = scmp.ne.s32.totalorder %s140, %s143
      %p149 = scmp.eq.s32.totalorder %s18, 0
      %p150 = por %p148, %p149
      %p151 = scmp.ne.s32.totalorder %s140, %s143
      %p152 = scmp.eq.s32.totalorder %s23, 1
      %p153 = por %p151, %p152
      %p154 = scmp.ne.s32.totalorder %s143, %s144
      %p155 = scmp.eq.s32.totalorder %s23, 0
      %p156 = por %p154, %p155
      %p157 = scmp.ne.s32.totalorder %s143, %s144
      %p158 = scmp.eq.s32.totalorder %s24, 1
      %p159 = por %p157, %p158
      %p161 = scmp.ne.s32.totalorder %s144, %s160
      %p162 = scmp.eq.s32.totalorder %s24, 0
      %p163 = por %p161, %p162
      %s164 = ssub.s32 %s25, %s37
      %s165 = ssub.s32 %s26, %s33
      %s166 = sor.u32 %s164, %s165
      %p167 = scmp.eq.s32.totalorder %s166, 0
      %s169 = sadd.s32 %s168, 1
      %s170 = scalar_select %p167, %s168, %s169
      %p173 = pneg %p167
      %p174 = scmp.eq.s32.totalorder %s18, 1
      %p175 = por %p173, %p174
      %p176 = scmp.ne.s32.totalorder %s168, %s171
      %p177 = scmp.eq.s32.totalorder %s18, 0
      %p178 = por %p176, %p177
      %p179 = scmp.ne.s32.totalorder %s168, %s171
      %p180 = scmp.eq.s32.totalorder %s23, 1
      %p181 = por %p179, %p180
      %p182 = scmp.ne.s32.totalorder %s171, %s172
      %p183 = scmp.eq.s32.totalorder %s23, 0
      %p184 = por %p182, %p183
      %p185 = scmp.ne.s32.totalorder %s171, %s172
      %p186 = scmp.eq.s32.totalorder %s24, 1
      %p187 = por %p185, %p186
      %p189 = scmp.ne.s32.totalorder %s172, %s188
      %p190 = scmp.eq.s32.totalorder %s24, 0
      %p191 = por %p189, %p190
      %p192 = scmp.le.s32.totalorder 1, %s18
      %p193 = scmp.lt.s32.totalorder %s18, 3
      %p194 = pnand %p192, %p193
      %p195 = pneg %p194
      // Predicated region
      $region9: #{tpu_custom_call.1} parent=5 // pred_check
        _
      $region10: #{tpu_custom_call.1} parent=5 // pred_check_branch
        %197 = sbr.rel (%p194) target = $region12
      $region11: #{tpu_custom_call.1} parent=5 // pred_region
        %s198 = ssub.s32 %s18, 1
        // Predicated region
        $region13: #{tpu_custom_call.1} parent=11 // pred_check
          %p199 = pneg %p79
        $region14: #{tpu_custom_call.1} parent=11 // pred_check_branch
          %201 = sbr.rel (%p199) target = $region16
        $region15: #{tpu_custom_call.1} parent=11 // pred_region
          _
        $region16: #{tpu_custom_call.1} parent=11 // pred_fallthru
          _
        // Predicated region
        $region17: #{tpu_custom_call.1} parent=11 // pred_check
          %p202 = pneg %p100
        $region18: #{tpu_custom_call.1} parent=11 // pred_check_branch
          %204 = sbr.rel (%p202) target = $region20
        $region19: #{tpu_custom_call.1} parent=11 // pred_region
          _
        $region20: #{tpu_custom_call.1} parent=11 // pred_fallthru
          _
      $region12: #{tpu_custom_call.1} parent=5 // pred_fallthru
        _
      %p205 = scmp.lt.s32.totalorder %s18, 2
      // Predicated region
      $region21: #{tpu_custom_call.1} parent=5 // pred_check
        %p206 = pneg %p205
      $region22: #{tpu_custom_call.1} parent=5 // pred_check_branch
        %208 = sbr.rel (%p206) target = $region24
      $region23: #{tpu_custom_call.1} parent=5 // pred_region
        // Predicated region
        $region25: #{tpu_custom_call.1} parent=23 // pred_check
          %p209 = pneg %p52
        $region26: #{tpu_custom_call.1} parent=23 // pred_check_branch
          %211 = sbr.rel (%p209) target = $region28
        $region27: #{tpu_custom_call.1} parent=23 // pred_region
          %p212 = scmp.lt.s32.totalorder %s25, 1
          %s213 = scalar_select %p212, %s25, 1
          %p214 = scmp.lt.s32.totalorder %s26, 0
          %s215 = scalar_select %p214, %s26, 0
          %s216 = sadd.s32 %s215, %s213
          %s217 = smul.addr %s216, 8
          %s218 = scalar_lea.vmem %s0, %s217
        $region28: #{tpu_custom_call.1} parent=23 // pred_fallthru
          _
      $region24: #{tpu_custom_call.1} parent=5 // pred_fallthru
        _
      %p219 = scmp.le.s32.totalorder 1, %s18
      %p220 = scmp.lt.s32.totalorder %s18, 3
      %p221 = pnand %p219, %p220
      %p222 = pneg %p221
      // Predicated region
      $region29: #{tpu_custom_call.1} parent=5 // pred_check
        _
      $region30: #{tpu_custom_call.1} parent=5 // pred_check_branch
        %224 = sbr.rel (%p221) target = $region32
      $region31: #{tpu_custom_call.1} parent=5 // pred_region
        %s225 = ssub.s32 %s18, 1
        %p226 = scmp.lt.s32.totalorder %s27, 1
        %s227 = scalar_select %p226, %s27, 1
        %p228 = scmp.lt.s32.totalorder %s28, 0
        %s229 = scalar_select %p228, %s28, 0
        %s230 = sadd.s32 %s229, %s227
        %s231 = smul.addr %s230, 8
        %s232 = scalar_lea.vmem %s0, %s231
        %p233 = pneg %p58
        %p234 = pneg %p55
        %p235 = pneg %p79
        %p236 = pneg %p76
        %p237 = pneg %p100
        %p238 = pneg %p97
        %p239 = pneg %p128
        %p240 = pneg %p125
        %s241 = sand.u32 %s115, 1
        %s242 = scalar_lea.sflag [#allocation3], %s241
        %s243 = sand.u32 %s115, 1
        %s244 = smul.addr %s243, 4
        %s245 = scalar_lea.vmem [#allocation2], %s244
        %p246 = pneg %p156
        %p247 = pneg %p153
        %s248 = sand.u32 %s23, 1
        %s249 = scalar_lea.sflag [#allocation5], %s248
        %s250 = sand.u32 %s143, 1
        %s251 = smul.addr %s250, 4
        %s252 = scalar_lea.vmem [#allocation4], %s251
        %p253 = pneg %p184
        %p254 = pneg %p181
        %s255 = sand.u32 %s23, 1
        %s256 = scalar_lea.sflag [#allocation5], %s255
        %s257 = sand.u32 %s171, 1
        %s258 = smul.addr %s257, 4
        %s259 = scalar_lea.vmem [#allocation6], %s258
        %p260 = scmp.lt.s32.totalorder %s27, 1
        %s261 = scalar_select %p260, %s27, 1
        %p262 = scmp.lt.s32.totalorder %s28, 0
        %s263 = scalar_select %p262, %s28, 0
        %s264 = sadd.s32 %s263, %s261
        %s265 = smul.addr %s264, 8
        %s266 = scalar_lea.vmem %s0, %s265
        %v268 = vld [vmem:[%s266] sm:$0xff]
        %v269 = vpack.c.bf16 %v268, %v268
        %v270 = vld [vmem:[%s1] sm:$0xf]
        %v271 = vld [vmem:[%s1 + $0x4] sm:$0xf]
        %v272 = vld [vmem:[%s1 + $0x8] sm:$0xf]
        %v273 = vld [vmem:[%s1 + $0xc] sm:$0xf]
        %v274 = vld [vmem:[%s1 + $0x10] sm:$0xf]
        %v275 = vld [vmem:[%s1 + $0x14] sm:$0xf]
        %v276 = vld [vmem:[%s1 + $0x18] sm:$0xf]
        %v277 = vld [vmem:[%s1 + $0x1c] sm:$0xf]
        %v278 = vld [vmem:[%s1 + $0x20] sm:$0xf]
        %v279 = vld [vmem:[%s1 + $0x24] sm:$0xf]
        %v280 = vld [vmem:[%s1 + $0x28] sm:$0xf]
        %v281 = vld [vmem:[%s1 + $0x2c] sm:$0xf]
        %v282 = vld [vmem:[%s2] sm:$0x1]
        %v284 = vperm.slane %v282, 0
        %v298 = vunpack.c.l.b16 %v270
        %v299 = vunpack.c.l.b16 %v271
        %v300 = vunpack.c.l.b16 %v272
        %v301 = vunpack.c.l.b16 %v273
        %v302 = vunpack.c.l.b16 %v274
        %v303 = vunpack.c.l.b16 %v275
        %v304 = vunpack.c.l.b16 %v276
        %v305 = vunpack.c.l.b16 %v277
        %v306 = vunpack.c.l.b16 %v278
        %v307 = vunpack.c.l.b16 %v279
        %v308 = vunpack.c.l.b16 %v280
        %v309 = vunpack.c.l.b16 %v281
        %v310 = vpack.c.b16 %v299, %v298
        %v311 = vpack.c.b16 %v301, %v300
        %v312 = vpack.c.b16 %v303, %v302
        %v313 = vpack.c.b16 %v305, %v304
        %v314 = vpack.c.b16 %v307, %v306
        %v315 = vpack.c.b16 %v309, %v308
        %vm316 = vcmask 261120
        %v318 = vsel %vm316, %v269, 0
        %v321 = vsel %vm316, %v310, 0
        %v324 = vsel %vm316, %v311, 0
        %v327 = vsel %vm316, %v312, 0
        %v330 = vsel %vm316, %v313, 0
        %v333 = vsel %vm316, %v314, 0
        %v336 = vsel %vm316, %v315, 0
        %338 = vmatpush.bf16.xpose.msra.mxu0 0
        %339 = vmatpush.bf16.xpose.msra.mxu0 0
        %340 = vmatpush.bf16.xpose.msra.mxu0 %v336
        %341 = vmatpush.bf16.xpose.msra.mxu0 %v333
        %342 = vmatpush.bf16.xpose.msra.mxu0 %v330
        %343 = vmatpush.bf16.xpose.msra.mxu0 %v327
        %344 = vmatpush.bf16.xpose.msra.mxu0 %v324
        %345 = vmatpush.bf16.xpose.msra.mxu0 %v321
        %346 = vmatmul.bf16.gmra.mxu0 %v318
        %v347 = vpop.f32.mrf.mxu0
        %v348 = vadd.f32 %v284, %v347
        %v349 = vpop.f32.mrf.mxu0
        %350 = vdwg.mxu0
        %v351 = vmul.f32 %v348, 0.35355338
        %v352 = vpack.c.bf16 %v351, %v351
        %vm353 = vcmask 257024
        %354 = vst.msk [vmem:[%s245] sm:$0xf] %vm353, %v352
        %v355 = vpack.c.bf16 %v348, %v348
        %357 = vrot.lane.b32.xlu0 %v355, 96
        %v358 = vpop.permute.xlu0 %357
        %360 = vst.msk [vmem:[%s252] sm:$0xf] %vm353, %v358
        %361 = vrot.lane.b32.xlu0 %v355, 64
        %v362 = vpop.permute.xlu0 %361
        %364 = vst.msk [vmem:[%s259] sm:$0xf] %vm353, %v362
        %s365 = sand.u32 %s115, 1
        %s366 = scalar_lea.sflag [#allocation3], %s365
        %s367 = sand.u32 %s115, 1
        %s368 = smul.addr %s367, 4
        %s369 = scalar_lea.vmem [#allocation2], %s368
        %s370 = sand.u32 %s23, 1
        %s371 = scalar_lea.sflag [#allocation5], %s370
        %s372 = sand.u32 %s143, 1
        %s373 = smul.addr %s372, 4
        %s374 = scalar_lea.vmem [#allocation4], %s373
        %s375 = sand.u32 %s23, 1
        %s376 = scalar_lea.sflag [#allocation5], %s375
        %s377 = sand.u32 %s171, 1
        %s378 = smul.addr %s377, 4
        %s379 = scalar_lea.vmem [#allocation6], %s378
        // Predicated region
        $region33: #{tpu_custom_call.1} parent=31 // pred_check
          %p380 = pneg %p125
        $region34: #{tpu_custom_call.1} parent=31 // pred_check_branch
          %382 = sbr.rel (%p380) target = $region36
        $region35: #{tpu_custom_call.1} parent=31 // pred_region
          %384 = vsyncadd %s366, 0
          %s385 = sadd.s32 %s28, %s27
          %s386 = smul.addr %s385, 4
          %s387 = scalar_lea.hbm %s3, %s386
          %s389 = sshll.u32 %s369, 4
          %s390 = int_to_ptr.vmem [resolvable:$true] %s389
          %s391 = sshll.u32 %s387, 4
          %s392 = int_to_ptr.hbm [resolvable:$true] %s391
          %394 = dma.vmem_to_hbm [thread:$0]  %s390, 64, %s392, %s366
        $region36: #{tpu_custom_call.1} parent=31 // pred_fallthru
          _
        // Predicated region
        $region37: #{tpu_custom_call.1} parent=31 // pred_check
          %p395 = pneg %p153
        $region38: #{tpu_custom_call.1} parent=31 // pred_check_branch
          %397 = sbr.rel (%p395) target = $region40
        $region39: #{tpu_custom_call.1} parent=31 // pred_region
          %399 = vsyncadd %s371, 0
          %s400 = sadd.s32 %s28, %s27
          %s401 = smul.addr %s400, 4
          %s402 = scalar_lea.hbm %s4, %s401
          %s404 = sshll.u32 %s374, 4
          %s405 = int_to_ptr.vmem [resolvable:$true] %s404
          %s406 = sshll.u32 %s402, 4
          %s407 = int_to_ptr.hbm [resolvable:$true] %s406
          %409 = dma.vmem_to_hbm [thread:$0]  %s405, 64, %s407, %s371
        $region40: #{tpu_custom_call.1} parent=31 // pred_fallthru
          _
        // Predicated region
        $region41: #{tpu_custom_call.1} parent=31 // pred_check
          %p410 = pneg %p181
        $region42: #{tpu_custom_call.1} parent=31 // pred_check_branch
          %412 = sbr.rel (%p410) target = $region44
        $region43: #{tpu_custom_call.1} parent=31 // pred_region
          %414 = vsyncadd %s376, 0
          %s415 = sadd.s32 %s28, %s27
          %s416 = smul.addr %s415, 4
          %s417 = scalar_lea.hbm %s5, %s416
          %s419 = sshll.u32 %s379, 4
          %s420 = int_to_ptr.vmem [resolvable:$true] %s419
          %s421 = sshll.u32 %s417, 4
          %s422 = int_to_ptr.hbm [resolvable:$true] %s421
          %424 = dma.vmem_to_hbm [thread:$0]  %s420, 64, %s422, %s376
        $region44: #{tpu_custom_call.1} parent=31 // pred_fallthru
          _
      $region32: #{tpu_custom_call.1} parent=5 // pred_fallthru
        _
      %p425 = scmp.le.s32.totalorder 2, %s18
      // Predicated region
      $region45: #{tpu_custom_call.1} parent=5 // pred_check
        %p426 = pneg %p425
      $region46: #{tpu_custom_call.1} parent=5 // pred_check_branch
        %428 = sbr.rel (%p426) target = $region48
      $region47: #{tpu_custom_call.1} parent=5 // pred_region
        %s429 = ssub.s32 %s18, 2
        // Predicated region
        $region49: #{tpu_custom_call.1} parent=47 // pred_check
          %p430 = pneg %p131
        $region50: #{tpu_custom_call.1} parent=47 // pred_check_branch
          %432 = sbr.rel (%p430) target = $region52
        $region51: #{tpu_custom_call.1} parent=47 // pred_region
          %s433 = sand.u32 %s116, 1
          %s434 = scalar_lea.sflag [#allocation3], %s433
          %s435 = sand.u32 %s116, 1
          %s436 = smul.addr %s435, 4
          %s437 = scalar_lea.vmem [#allocation2], %s436
          %439 = dma.done %s434, 64
        $region52: #{tpu_custom_call.1} parent=47 // pred_fallthru
          _
        // Predicated region
        $region53: #{tpu_custom_call.1} parent=47 // pred_check
          %p440 = pneg %p159
        $region54: #{tpu_custom_call.1} parent=47 // pred_check_branch
          %442 = sbr.rel (%p440) target = $region56
        $region55: #{tpu_custom_call.1} parent=47 // pred_region
          %s443 = sand.u32 %s24, 1
          %s444 = scalar_lea.sflag [#allocation5], %s443
          %s445 = sand.u32 %s144, 1
          %s446 = smul.addr %s445, 4
          %s447 = scalar_lea.vmem [#allocation4], %s446
          %449 = dma.done %s444, 64
        $region56: #{tpu_custom_call.1} parent=47 // pred_fallthru
          _
        // Predicated region
        $region57: #{tpu_custom_call.1} parent=47 // pred_check
          %p450 = pneg %p187
        $region58: #{tpu_custom_call.1} parent=47 // pred_check_branch
          %452 = sbr.rel (%p450) target = $region60
        $region59: #{tpu_custom_call.1} parent=47 // pred_region
          %s453 = sand.u32 %s24, 1
          %s454 = scalar_lea.sflag [#allocation5], %s453
          %s455 = sand.u32 %s172, 1
          %s456 = smul.addr %s455, 4
          %s457 = scalar_lea.vmem [#allocation6], %s456
          %459 = dma.done %s454, 64
        $region60: #{tpu_custom_call.1} parent=47 // pred_fallthru
          _
      $region48: #{tpu_custom_call.1} parent=5 // pred_fallthru
        _
    $region6: #{tpu_custom_call.1} parent=1 // loop_footer
      %s22 = sadd.s32 1, %s18
    $region7: #{tpu_custom_call.1} parent=1 // loop_footer_branch
      %17 = sbr.rel target = $region3
    $region8: #{tpu_custom_call.1} parent=1 // loop_exit
      _
    %460 = vsyncpa [#allocation3], 1
    %s461 = scalar_lea.sflag [#allocation3], 1
    %462 = vsyncpa %s461, 1
    %463 = vsyncpa [#allocation5], 1
    %s464 = scalar_lea.sflag [#allocation5], 1
    %465 = vsyncpa %s464, 1

</llo_original>
